<compile_context>
chip_gen: v6e
topology: v6e:2x2x1
jax: 0.10.0
libtpu: 0.0.40
codegen_flags: <defaults>
</compile_context>

<pallas_src>
import math

import jax
import jax.numpy as jnp
from jax.experimental import pallas as pl
from jax.experimental.pallas import tpu as pltpu

LOG_STD_MAX = 2.0
LOG_STD_MIN = -20.0
_HALF_LOG_2PI = 0.5 * math.log(2.0 * math.pi)
_LOG_2 = math.log(2.0)


def _round_up(x, m):
    return ((x + m - 1) // m) * m


def _vmem_limit_bytes():
    """Scoped-VMEM limit: 3/4 of detected capacity, capped at 48 MiB.

    The cap keeps the limit below v7x's 64 MiB physical VMEM even if chip
    detection fails (fallback assumes the smallest generation)."""
    try:
        cap = int(pltpu.get_tpu_info().vmem_capacity_bytes)
    except Exception:
        cap = 64 << 20  # conservative fallback (v7x per-TC VMEM)
    return min(cap * 3 // 4, 48 << 20)


def prepare_actor_params(params, matmul_dtype=jnp.float32):
    """One-time parameter prep (call once, reuse across forward calls).

    Fuses the mu / log_sigma heads into a single (hidden, 2*act_dim) matmul and
    optionally casts the trunk weights to bf16 for the MXU.  The head matmul is
    kept in f32: exp(log_std) amplifies quantization error into std / logp.
    Biases stay f32 (elementwise tail is f32)."""
    return {
        "w1": params["w1"].astype(matmul_dtype),
        "b1": params["b1"],
        "w2": params["w2"].astype(matmul_dtype),
        "b2": params["b2"],
        "w_head": jnp.concatenate([params["wmu"], params["wls"]], axis=1),
        "b_head": jnp.concatenate([params["bmu"], params["bls"]], axis=1),
        "w_mu": params["wmu"],
        "b_mu": params["bmu"],
        "act_dim": int(params["wmu"].shape[1]),
    }


def _make_actor_kernel(act_dim, deterministic, with_logprob):
    """Builds a lean kernel variant for the given static flags."""
    need_eps = not deterministic
    need_std = with_logprob or not deterministic

    def _dot(a, w_ref):
        w = w_ref[...]
        # cast activations to the weight operand dtype (bf16 fast path on trunk),
        # always f32 accumulate
        return jnp.dot(a.astype(w.dtype), w, preferred_element_type=jnp.float32)

    def kernel(*refs):
        it = iter(refs)
        obs_ref = next(it)
        w1_ref, b1_ref = next(it), next(it)
        w2_ref, b2_ref = next(it), next(it)
        wh_ref, bh_ref = next(it), next(it)
        eps_ref = next(it) if need_eps else None
        pi_ref = next(it)
        logp_ref = next(it) if with_logprob else None

        # ---- MLP trunk: Linear -> ReLU -> Linear -> ReLU (output_activation=ReLU)
        h1 = jnp.maximum(_dot(obs_ref[...], w1_ref) + b1_ref[...], 0.0)
        h2 = jnp.maximum(_dot(h1, w2_ref) + b2_ref[...], 0.0)

        # ---- fused heads: single f32 matmul producing [mu | log_std]
        head = _dot(h2, wh_ref) + bh_ref[...]
        if need_std:
            mu = head[:, :act_dim]
            log_std = jnp.clip(head[:, act_dim:], LOG_STD_MIN, LOG_STD_MAX)
        else:
            mu = head  # head is mu-only in this variant

        # ---- reparameterized sample (rsample): pi = mu + std * eps
        if deterministic:
            pi = mu
        else:
            eps = eps_ref[...]
            pi = mu + jnp.exp(log_std) * eps

        if with_logprob:
            # shared transcendental: e = exp(-2|pi|) feeds both tanh and softplus
            e = jnp.exp(-2.0 * jnp.abs(pi))
            t = (1.0 - e) / (1.0 + e)                 # tanh(|pi|)
            pi_ref[...] = jnp.where(pi >= 0.0, t, -t)  # tanh(pi), single full store

            # Normal(mu, std).log_prob(pi).sum(-1); (pi - mu) / std == eps exactly
            if deterministic:
                log_prob = -log_std - _HALF_LOG_2PI
            else:
                log_prob = -0.5 * (eps * eps) - log_std - _HALF_LOG_2PI
            # tanh-squash correction: 2*(log2 - pi - softplus(-2*pi)),
            # stable softplus(-2*pi) = max(-2*pi, 0) + log1p(e)   (reuses e)
            softplus = jnp.maximum(-2.0 * pi, 0.0) + jnp.log1p(e)
            corr = 2.0 * (_LOG_2 - pi - softplus)
            # single fused reduction, single full store
            logp_ref[...] = jnp.sum(log_prob - corr, axis=-1, keepdims=True)
        else:
            # no shared exp needed: plain tanh goes to the (otherwise idle) EUP slot
            pi_ref[...] = jnp.tanh(pi)

    return kernel


def squashed_gaussian_actor_forward(obs, prep, eps=None, *, deterministic=False,
                                    with_logprob=True, block_b=None):
    """Runs the actor forward pass via a Pallas kernel.

    obs:  (B, obs_dim) float32 (or (obs_dim,) for a single observation)
    prep: output of prepare_actor_params
    eps:  (B, act_dim) standard-normal noise (only needed if not deterministic)
    Returns (pi_action (B, act_dim), logp_pi (B,) or None).
    """
    single = obs.ndim == 1
    if single:
        obs = obs[None, :]
        if eps is not None and eps.ndim == 1:
            eps = eps[None, :]

    B = obs.shape[0]
    act_dim = prep["act_dim"]
    need_eps = not deterministic
    need_std = with_logprob or not deterministic
    if need_eps and eps is None:
        raise ValueError("eps must be provided unless deterministic=True")

    w_head = prep["w_head"] if need_std else prep["w_mu"]
    b_head = prep["b_head"] if need_std else prep["b_mu"]

    # ---- batch tiling: large tiles amortize the ~0.35us/step overhead; per-tile
    # VMEM at tb=4096 is ~1 MiB so this fits every generation comfortably.
    if block_b is None:
        block_b = 4096
    tb = min(block_b, _round_up(B, 8))
    if B > 512 and pl.cdiv(B, tb) < 2:
        # keep >= 2 grid steps so v7x's 2 TensorCores both get work and the
        # input/output DMA overlaps with compute.
        tb = _round_up(pl.cdiv(B, 2), 8)
    grid = (pl.cdiv(B, tb),)
    # NOTE: no wrapper-side padding — the (possibly ragged) last block is handled
    # by Pallas; garbage padded rows may produce NaN through exp(log_std) but are
    # discarded on writeback.

    args = [obs, prep["w1"], prep["b1"], prep["w2"], prep["b2"], w_head, b_head]
    tiled = lambda a: pl.BlockSpec((tb, a.shape[1]), lambda i: (i, 0))
    pinned = lambda a: pl.BlockSpec(a.shape, lambda i: (0, 0))
    in_specs = [tiled(obs)] + [pinned(a) for a in args[1:]]
    if need_eps:
        args.append(eps)
        in_specs.append(tiled(eps))

    kernel = _make_actor_kernel(act_dim, deterministic, with_logprob)
    cparams = pltpu.CompilerParams(
        dimension_semantics=("parallel",),   # batch tiles shard over v7x's 2 TCs
        vmem_limit_bytes=_vmem_limit_bytes(),
    )

    if with_logprob:
        pi_out, logp_out = pl.pallas_call(
            kernel,
            out_shape=(jax.ShapeDtypeStruct((B, act_dim), jnp.float32),
                       jax.ShapeDtypeStruct((B, 1), jnp.float32)),
            grid=grid,
            in_specs=in_specs,
            out_specs=(pl.BlockSpec((tb, act_dim), lambda i: (i, 0)),
                       pl.BlockSpec((tb, 1), lambda i: (i, 0))),
            compiler_params=cparams,
        )(*args)
        logp_pi = logp_out[:, 0]
    else:
        pi_out = pl.pallas_call(
            kernel,
            out_shape=jax.ShapeDtypeStruct((B, act_dim), jnp.float32),
            grid=grid,
            in_specs=in_specs,
            out_specs=pl.BlockSpec((tb, act_dim), lambda i: (i, 0)),
            compiler_params=cparams,
        )(*args)
        logp_pi = None

    if single:
        pi_out = pi_out[0]
        logp_pi = None if logp_pi is None else logp_pi[0]
    # TODO(synk): act_limits rescaling (clamp to [low, high]) is omitted since
    # act_limits=None in this synthetic setup.
    return pi_out, logp_pi


def _reference_forward(obs, params, eps):
    """Pure-JAX reference mirroring the PyTorch module semantics."""
    h1 = jnp.maximum(obs @ params["w1"] + params["b1"], 0.0)
    h2 = jnp.maximum(h1 @ params["w2"] + params["b2"], 0.0)
    mu = h2 @ params["wmu"] + params["bmu"]
    log_std = jnp.clip(h2 @ params["wls"] + params["bls"],
                       LOG_STD_MIN, LOG_STD_MAX)
    std = jnp.exp(log_std)
    pi = mu + std * eps
    logp = jnp.sum(-0.5 * ((pi - mu) / std) ** 2 - log_std
                   - 0.5 * jnp.log(2.0 * jnp.pi), axis=-1)
    logp -= jnp.sum(2.0 * (jnp.log(2.0) - pi - jax.nn.softplus(-2.0 * pi)),
                    axis=-1)
    return jnp.tanh(pi), logp


def init_params(key, obs_dim, hidden_sizes, act_dim):
    """Deterministic synthetic parameter init (uniform, nn.Linear-like scale)."""
    sizes = [obs_dim] + list(hidden_sizes)
    params = {}
    names = []
    for i in range(len(sizes) - 1):
        names.append((f"w{i+1}", f"b{i+1}", sizes[i], sizes[i + 1]))
    names.append(("wmu", "bmu", hidden_sizes[-1], act_dim))
    names.append(("wls", "bls", hidden_sizes[-1], act_dim))
    keys = jax.random.split(key, 2 * len(names))
    for j, (wn, bn, fan_in, fan_out) in enumerate(names):
        bound = 1.0 / math.sqrt(fan_in)
        params[wn] = jax.random.uniform(keys[2 * j], (fan_in, fan_out),
                                        jnp.float32, -bound, bound)
        params[bn] = jax.random.uniform(keys[2 * j + 1], (1, fan_out),
                                        jnp.float32, -bound, bound)
    return params


if __name__ == "__main__":
    B, OBS_DIM, ACT_DIM = 8, 16, 8
    HIDDEN = (32, 32)

    key = jax.random.PRNGKey(0)
    k_params, k_obs, k_eps = jax.random.split(key, 3)

    params = init_params(k_params, OBS_DIM, HIDDEN, ACT_DIM)
    obs = jax.random.normal(k_obs, (B, OBS_DIM), jnp.float32)
    eps = jax.random.normal(k_eps, (B, ACT_DIM), jnp.float32)

    prep_f32 = prepare_actor_params(params)                      # one-time prep
    prep_bf16 = prepare_actor_params(params, jnp.bfloat16)       # bf16 trunk, f32 head

    ref_pi, ref_logp = _reference_forward(obs, params, eps)
    ref_pi_d, ref_logp_d = _reference_forward(obs, params, jnp.zeros_like(eps))

    # 1) stochastic + log-prob, f32 matmuls (accuracy reference path)
    pi_action, logp_pi = squashed_gaussian_actor_forward(
        obs, prep_f32, eps, deterministic=False, with_logprob=True)
    jax.block_until_ready((pi_action, logp_pi))
    assert pi_action.shape == (B, ACT_DIM) and logp_pi.shape == (B,)
    assert jnp.allclose(pi_action, ref_pi, atol=5e-5, rtol=1e-5)
    assert jnp.allclose(logp_pi, ref_logp, atol=5e-4, rtol=1e-4)

    # 2) deterministic + log-prob (lean variant: no eps input, no exp(log_std))
    pi_d, logp_d = squashed_gaussian_actor_forward(
        obs, prep_f32, deterministic=True, with_logprob=True)
    jax.block_until_ready((pi_d, logp_d))
    assert jnp.allclose(pi_d, ref_pi_d, atol=5e-5, rtol=1e-5)
    assert jnp.allclose(logp_d, ref_logp_d, atol=5e-4, rtol=1e-4)

    # 3) stochastic, no log-prob (lean variant: plain tanh, no log-prob block)
    pi_nl, logp_nl = squashed_gaussian_actor_forward(
        obs, prep_f32, eps, deterministic=False, with_logprob=False)
    jax.block_until_ready(pi_nl)
    assert logp_nl is None
    assert jnp.allclose(pi_nl, ref_pi, atol=5e-5, rtol=1e-5)

    # 4) deterministic, no log-prob (mu-only head)
    pi_dn, logp_dn = squashed_gaussian_actor_forward(
        obs, prep_f32, deterministic=True, with_logprob=False)
    jax.block_until_ready(pi_dn)
    assert logp_dn is None
    assert jnp.allclose(pi_dn, ref_pi_d, atol=5e-5, rtol=1e-5)

    # 5) bf16 trunk-MXU fast path (f32 head / accumulate) -- loose tolerance
    pi_bf, logp_bf = squashed_gaussian_actor_forward(
        obs, prep_bf16, eps, deterministic=False, with_logprob=True)
    jax.block_until_ready((pi_bf, logp_bf))
    assert bool(jnp.all(jnp.isfinite(pi_bf))) and bool(jnp.all(jnp.isfinite(logp_bf)))
    assert jnp.allclose(pi_bf, ref_pi, atol=0.1)
    assert jnp.allclose(logp_bf, ref_logp, atol=1.0)

    print("KERNEL_OK")
</pallas_src>

<mosaic_0001>
module attributes {stable_mosaic.version = 11 : i64} {
  func.func @kernel(%arg0: i32, %arg1: memref<8x16xf32, #tpu.memory_space<vmem>>, %arg2: memref<16x32xf32, #tpu.memory_space<vmem>>, %arg3: memref<1x32xf32, #tpu.memory_space<vmem>>, %arg4: memref<32x32xf32, #tpu.memory_space<vmem>>, %arg5: memref<1x32xf32, #tpu.memory_space<vmem>>, %arg6: memref<32x16xf32, #tpu.memory_space<vmem>>, %arg7: memref<1x16xf32, #tpu.memory_space<vmem>>, %arg8: memref<8x8xf32, #tpu.memory_space<vmem>>, %arg9: memref<8x8xf32, #tpu.memory_space<vmem>>, %arg10: memref<8x1xf32, #tpu.memory_space<vmem>>) attributes {dimension_semantics = [#tpu.dimension_semantics<parallel>], iteration_bounds = array<i64: 1>, scalar_prefetch = 0 : i64, scratch_operands = 0 : i64, tpu.core_type = #tpu.core_type<tc>, window_params = [{transform_indices = @transform_0, window_bounds = array<i64: 8, 16>}, {pipeline_mode = #tpu.pipeline_mode<synchronous>, transform_indices = @transform_1, window_bounds = array<i64: 16, 32>}, {pipeline_mode = #tpu.pipeline_mode<synchronous>, transform_indices = @transform_2, window_bounds = array<i64: 1, 32>}, {pipeline_mode = #tpu.pipeline_mode<synchronous>, transform_indices = @transform_3, window_bounds = array<i64: 32, 32>}, {pipeline_mode = #tpu.pipeline_mode<synchronous>, transform_indices = @transform_4, window_bounds = array<i64: 1, 32>}, {pipeline_mode = #tpu.pipeline_mode<synchronous>, transform_indices = @transform_5, window_bounds = array<i64: 32, 16>}, {pipeline_mode = #tpu.pipeline_mode<synchronous>, transform_indices = @transform_6, window_bounds = array<i64: 1, 16>}, {transform_indices = @transform_7, window_bounds = array<i64: 8, 8>}, {transform_indices = @transform_8, window_bounds = array<i64: 8, 8>}, {transform_indices = @transform_9, window_bounds = array<i64: 8, 1>}]} {
    %c0 = arith.constant 0 : index
    %c0_0 = arith.constant 0 : index
    %0 = vector.load %arg1[%c0, %c0_0] : memref<8x16xf32, #tpu.memory_space<vmem>>, vector<8x16xf32>
    %c0_1 = arith.constant 0 : index
    %c0_2 = arith.constant 0 : index
    %1 = vector.load %arg2[%c0_1, %c0_2] : memref<16x32xf32, #tpu.memory_space<vmem>>, vector<16x32xf32>
    %cst = arith.constant dense<0.000000e+00> : vector<8x32xf32>
    %2 = tpu.matmul %0, %1, %cst {dimension_numbers = #tpu.dot_dimension_numbers<[1], [0], [0], [1], [0, 0, 1, 1], [], []>} : vector<8x16xf32>, vector<16x32xf32>, vector<8x32xf32> -> vector<8x32xf32>
    %c0_3 = arith.constant 0 : index
    %c0_4 = arith.constant 0 : index
    %3 = vector.load %arg3[%c0_3, %c0_4] : memref<1x32xf32, #tpu.memory_space<vmem>>, vector<1x32xf32>
    %4 = vector.broadcast %3 : vector<1x32xf32> to vector<8x32xf32>
    %5 = arith.addf %2, %4 : vector<8x32xf32>
    %cst_5 = arith.constant 0.000000e+00 : f32
    %6 = vector.broadcast %cst_5 : f32 to vector<8x32xf32>
    %7 = arith.maximumf %5, %6 : vector<8x32xf32>
    %c0_6 = arith.constant 0 : index
    %c0_7 = arith.constant 0 : index
    %8 = vector.load %arg4[%c0_6, %c0_7] : memref<32x32xf32, #tpu.memory_space<vmem>>, vector<32x32xf32>
    %cst_8 = arith.constant dense<0.000000e+00> : vector<8x32xf32>
    %9 = tpu.matmul %7, %8, %cst_8 {dimension_numbers = #tpu.dot_dimension_numbers<[1], [0], [0], [1], [0, 0, 1, 1], [], []>} : vector<8x32xf32>, vector<32x32xf32>, vector<8x32xf32> -> vector<8x32xf32>
    %c0_9 = arith.constant 0 : index
    %c0_10 = arith.constant 0 : index
    %10 = vector.load %arg5[%c0_9, %c0_10] : memref<1x32xf32, #tpu.memory_space<vmem>>, vector<1x32xf32>
    %11 = vector.broadcast %10 : vector<1x32xf32> to vector<8x32xf32>
    %12 = arith.addf %9, %11 : vector<8x32xf32>
    %cst_11 = arith.constant 0.000000e+00 : f32
    %13 = vector.broadcast %cst_11 : f32 to vector<8x32xf32>
    %14 = arith.maximumf %12, %13 : vector<8x32xf32>
    %c0_12 = arith.constant 0 : index
    %c0_13 = arith.constant 0 : index
    %15 = vector.load %arg6[%c0_12, %c0_13] : memref<32x16xf32, #tpu.memory_space<vmem>>, vector<32x16xf32>
    %cst_14 = arith.constant dense<0.000000e+00> : vector<8x16xf32>
    %16 = tpu.matmul %14, %15, %cst_14 {dimension_numbers = #tpu.dot_dimension_numbers<[1], [0], [0], [1], [0, 0, 1, 1], [], []>} : vector<8x32xf32>, vector<32x16xf32>, vector<8x16xf32> -> vector<8x16xf32>
    %c0_15 = arith.constant 0 : index
    %c0_16 = arith.constant 0 : index
    %17 = vector.load %arg7[%c0_15, %c0_16] : memref<1x16xf32, #tpu.memory_space<vmem>>, vector<1x16xf32>
    %18 = vector.broadcast %17 : vector<1x16xf32> to vector<8x16xf32>
    %19 = arith.addf %16, %18 : vector<8x16xf32>
    %20 = vector.extract_strided_slice %19 {offsets = [0, 0], sizes = [8, 8], strides = [1, 1]} : vector<8x16xf32> to vector<8x8xf32>
    %21 = vector.extract_strided_slice %19 {offsets = [0, 8], sizes = [8, 8], strides = [1, 1]} : vector<8x16xf32> to vector<8x8xf32>
    %cst_17 = arith.constant -2.000000e+01 : f32
    %cst_18 = arith.constant 2.000000e+00 : f32
    %22 = vector.broadcast %cst_17 : f32 to vector<8x8xf32>
    %23 = arith.maximumf %22, %21 : vector<8x8xf32>
    %24 = vector.broadcast %cst_18 : f32 to vector<8x8xf32>
    %25 = arith.minimumf %24, %23 : vector<8x8xf32>
    %c0_19 = arith.constant 0 : index
    %c0_20 = arith.constant 0 : index
    %26 = vector.load %arg8[%c0_19, %c0_20] : memref<8x8xf32, #tpu.memory_space<vmem>>, vector<8x8xf32>
    %27 = math.exp %25 : vector<8x8xf32>
    %28 = arith.mulf %27, %26 : vector<8x8xf32>
    %29 = arith.addf %20, %28 : vector<8x8xf32>
    %30 = math.absf %29 : vector<8x8xf32>
    %cst_21 = arith.constant -2.000000e+00 : f32
    %31 = vector.broadcast %cst_21 : f32 to vector<8x8xf32>
    %32 = arith.mulf %31, %30 : vector<8x8xf32>
    %33 = math.exp %32 : vector<8x8xf32>
    %cst_22 = arith.constant 1.000000e+00 : f32
    %34 = vector.broadcast %cst_22 : f32 to vector<8x8xf32>
    %35 = arith.subf %34, %33 : vector<8x8xf32>
    %cst_23 = arith.constant 1.000000e+00 : f32
    %36 = vector.broadcast %cst_23 : f32 to vector<8x8xf32>
    %37 = arith.addf %36, %33 : vector<8x8xf32>
    %38 = arith.divf %35, %37 : vector<8x8xf32>
    %cst_24 = arith.constant 0.000000e+00 : f32
    %39 = vector.broadcast %cst_24 : f32 to vector<8x8xf32>
    %40 = arith.cmpf oge, %29, %39 : vector<8x8xf32>
    %cst_25 = arith.constant 0.000000e+00 : f32
    %41 = vector.broadcast %cst_25 : f32 to vector<8x8xf32>
    %42 = arith.subf %41, %38 : vector<8x8xf32>
    %43 = arith.select %40, %38, %42 : vector<8x8xi1>, vector<8x8xf32>
    %c0_26 = arith.constant 0 : index
    %c0_27 = arith.constant 0 : index
    %44 = vector.load %arg9[%c0_26, %c0_27] : memref<8x8xf32, #tpu.memory_space<vmem>>, vector<8x8xf32>
    tpu.vector_store %arg9[%c0_26, %c0_27], %43 {strides = array<i32>} : memref<8x8xf32, #tpu.memory_space<vmem>>, vector<8x8xf32>,
    %45 = arith.mulf %26, %26 : vector<8x8xf32>
    %cst_28 = arith.constant -5.000000e-01 : f32
    %46 = vector.broadcast %cst_28 : f32 to vector<8x8xf32>
    %47 = arith.mulf %46, %45 : vector<8x8xf32>
    %48 = arith.subf %47, %25 : vector<8x8xf32>
    %cst_29 = arith.constant 0.918938517 : f32
    %49 = vector.broadcast %cst_29 : f32 to vector<8x8xf32>
    %50 = arith.subf %48, %49 : vector<8x8xf32>
    %cst_30 = arith.constant -2.000000e+00 : f32
    %51 = vector.broadcast %cst_30 : f32 to vector<8x8xf32>
    %52 = arith.mulf %51, %29 : vector<8x8xf32>
    %cst_31 = arith.constant 0.000000e+00 : f32
    %53 = vector.broadcast %cst_31 : f32 to vector<8x8xf32>
    %54 = arith.maximumf %52, %53 : vector<8x8xf32>
    %55 = math.log1p %33 : vector<8x8xf32>
    %56 = arith.addf %54, %55 : vector<8x8xf32>
    %cst_32 = arith.constant 0.693147182 : f32
    %57 = vector.broadcast %cst_32 : f32 to vector<8x8xf32>
    %58 = arith.subf %57, %29 : vector<8x8xf32>
    %59 = arith.subf %58, %56 : vector<8x8xf32>
    %cst_33 = arith.constant 2.000000e+00 : f32
    %60 = vector.broadcast %cst_33 : f32 to vector<8x8xf32>
    %61 = arith.mulf %60, %59 : vector<8x8xf32>
    %62 = arith.subf %50, %61 : vector<8x8xf32>
    %cst_34 = arith.constant dense<0.000000e+00> : vector<8xf32>
    %63 = vector.multi_reduction <add>, %62, %cst_34 [1] : vector<8x8xf32> to vector<8xf32>
    %64 = vector.shape_cast %63 : vector<8xf32> to vector<8x1xf32>
    %c0_35 = arith.constant 0 : index
    %c0_36 = arith.constant 0 : index
    %65 = vector.load %arg10[%c0_35, %c0_36] : memref<8x1xf32, #tpu.memory_space<vmem>>, vector<8x1xf32>
    tpu.vector_store %arg10[%c0_35, %c0_36], %64 {strides = array<i32>} : memref<8x1xf32, #tpu.memory_space<vmem>>, vector<8x1xf32>,
    return
  }
  func.func @transform_0(%arg0: i32) -> (i32, i32) {
    %c0_i32 = arith.constant 0 : i32
    %c0_i32_0 = arith.constant 0 : i32
    return %arg0, %c0_i32 : i32, i32
  }
  func.func @transform_1(%arg0: i32) -> (i32, i32) {
    %c0_i32 = arith.constant 0 : i32
    %c0_i32_0 = arith.constant 0 : i32
    %c0_i32_1 = arith.constant 0 : i32
    return %c0_i32, %c0_i32_0 : i32, i32
  }
  func.func @transform_2(%arg0: i32) -> (i32, i32) {
    %c0_i32 = arith.constant 0 : i32
    %c0_i32_0 = arith.constant 0 : i32
    %c0_i32_1 = arith.constant 0 : i32
    return %c0_i32, %c0_i32_0 : i32, i32
  }
  func.func @transform_3(%arg0: i32) -> (i32, i32) {
    %c0_i32 = arith.constant 0 : i32
    %c0_i32_0 = arith.constant 0 : i32
    %c0_i32_1 = arith.constant 0 : i32
    return %c0_i32, %c0_i32_0 : i32, i32
  }
  func.func @transform_4(%arg0: i32) -> (i32, i32) {
    %c0_i32 = arith.constant 0 : i32
    %c0_i32_0 = arith.constant 0 : i32
    %c0_i32_1 = arith.constant 0 : i32
    return %c0_i32, %c0_i32_0 : i32, i32
  }
  func.func @transform_5(%arg0: i32) -> (i32, i32) {
    %c0_i32 = arith.constant 0 : i32
    %c0_i32_0 = arith.constant 0 : i32
    %c0_i32_1 = arith.constant 0 : i32
    return %c0_i32, %c0_i32_0 : i32, i32
  }
  func.func @transform_6(%arg0: i32) -> (i32, i32) {
    %c0_i32 = arith.constant 0 : i32
    %c0_i32_0 = arith.constant 0 : i32
    %c0_i32_1 = arith.constant 0 : i32
    return %c0_i32, %c0_i32_0 : i32, i32
  }
  func.func @transform_7(%arg0: i32) -> (i32, i32) {
    %c0_i32 = arith.constant 0 : i32
    %c0_i32_0 = arith.constant 0 : i32
    return %arg0, %c0_i32 : i32, i32
  }
  func.func @transform_8(%arg0: i32) -> (i32, i32) {
    %c0_i32 = arith.constant 0 : i32
    %c0_i32_0 = arith.constant 0 : i32
    return %arg0, %c0_i32 : i32, i32
  }
  func.func @transform_9(%arg0: i32) -> (i32, i32) {
    %c0_i32 = arith.constant 0 : i32
    %c0_i32_0 = arith.constant 0 : i32
    return %arg0, %c0_i32 : i32, i32
  }
}

</mosaic_0001>

<llo_original>
// kernel: tpu_custom_call.1
$region0: #{tpu_custom_call.1}
  #allocation0 [shape = 'u32[]', space=smem, size = 0x4, offset = 0x4, fixed_abs, tag = 'smem constant byte address 0x4 - core index']
  #allocation1 [shape = 'u32[144,128]{1,0:T(1,128)}', space=vmem, size = 0x12000, scoped, tag = 'internal scratch']
  %s0 = inlined_call_operand.hbm [shape: f32[8,16], index: 0, kind: input, shape index: {}]
  %s1 = inlined_call_operand.vmem [shape: f32[16,32], index: 1, kind: input, shape index: {}]
  %s2 = inlined_call_operand.vmem [shape: f32[1,32], index: 2, kind: input, shape index: {}]
  %s3 = inlined_call_operand.vmem [shape: f32[32,32], index: 3, kind: input, shape index: {}]
  %s4 = inlined_call_operand.hbm [shape: f32[1,32], index: 4, kind: input, shape index: {}]
  %s5 = inlined_call_operand.vmem [shape: f32[32,16], index: 5, kind: input, shape index: {}]
  %s6 = inlined_call_operand.vmem [shape: f32[1,16], index: 6, kind: input, shape index: {}]
  %s7 = inlined_call_operand.vmem [shape: f32[8,8], index: 7, kind: input, shape index: {}]
  %s8 = inlined_call_operand.hbm [shape: f32[8,8], index: 8, kind: output, shape index: {0}]
  %s9 = inlined_call_operand.vmem [shape: f32[8,1], index: 9, kind: output, shape index: {1}]
  %10 = xla_tuple %s8, %s9
  %s11 = sld [smem:[#allocation0]]
  $region58: #{tpu_custom_call.1} parent=0
    _
  %s13 = ssub.s32 1, %s11
  %s14 = scalar_select 0, %s13, %s11
  $region1: #{tpu_custom_call.1} parent=0
    #allocation2 [shape = 'u8[4096]{0}', space=vmem, size = 0x1000, scoped, tag = 'input window, operand 0, single buffered']
    #allocation3 [shape = 's32[1]{0}', space=sflag, size = 0x4, scoped, tag = 'scoped memory for tpu_custom_call.1']
    #allocation4 [shape = 's32[1]{0}', space=sflag, size = 0x4, scoped, tag = 'scoped memory for tpu_custom_call.1']
    #allocation5 [shape = 'u8[512]{0}', space=vmem, size = 0x400, scoped, tag = 'input window, operand 4, single buffered']
    #allocation6 [shape = 's32[1]{0}', space=sflag, size = 0x4, scoped, tag = 'scoped memory for tpu_custom_call.1']
    #allocation7 [shape = 'u8[4096]{0}', space=vmem, size = 0x1000, scoped, tag = 'output window, operand 0, single buffered']
    %15 = vsyncpa [#allocation3], 0
    %16 = vsyncpa [#allocation6], 0
    %17 = vsyncpa [#allocation4], 0
    // Predicated region
    $region2: #{tpu_custom_call.1} parent=1 // pred_check
      _
    $region3: #{tpu_custom_call.1} parent=1 // pred_check_branch
      %19 = sbr.rel (0) target = $region5
    $region4: #{tpu_custom_call.1} parent=1 // pred_region
      %s21 = ssub.s32 128, 128
      %22 = vsyncadd [#allocation3], %s21
      %s24 = sshll.u32 [#allocation2], 4
      %s25 = int_to_ptr.vmem [resolvable:$true] %s24
      %27 = dma.hbm_to_vmem [thread:$0]  %s0, 128, %s25, [#allocation3]
    $region5: #{tpu_custom_call.1} parent=1 // pred_fallthru
      _
    // Predicated region
    $region6: #{tpu_custom_call.1} parent=1 // pred_check
      _
    $region7: #{tpu_custom_call.1} parent=1 // pred_check_branch
      %29 = sbr.rel (0) target = $region9
    $region8: #{tpu_custom_call.1} parent=1 // pred_region
      _
    $region9: #{tpu_custom_call.1} parent=1 // pred_fallthru
      _
    // Predicated region
    $region10: #{tpu_custom_call.1} parent=1 // pred_check
      _
    $region11: #{tpu_custom_call.1} parent=1 // pred_check_branch
      %31 = sbr.rel (0) target = $region13
    $region12: #{tpu_custom_call.1} parent=1 // pred_region
      _
    $region13: #{tpu_custom_call.1} parent=1 // pred_fallthru
      _
    // Predicated region
    $region14: #{tpu_custom_call.1} parent=1 // pred_check
      _
    $region15: #{tpu_custom_call.1} parent=1 // pred_check_branch
      %33 = sbr.rel (0) target = $region17
    $region16: #{tpu_custom_call.1} parent=1 // pred_region
      _
    $region17: #{tpu_custom_call.1} parent=1 // pred_fallthru
      _
    // Predicated region
    $region18: #{tpu_custom_call.1} parent=1 // pred_check
      _
    $region19: #{tpu_custom_call.1} parent=1 // pred_check_branch
      %35 = sbr.rel (0) target = $region21
    $region20: #{tpu_custom_call.1} parent=1 // pred_region
      %s37 = ssub.s32 16, 16
      %38 = vsyncadd [#allocation6], %s37
      %s40 = sshll.u32 [#allocation5], 4
      %s41 = int_to_ptr.vmem [resolvable:$true] %s40
      %43 = dma.hbm_to_vmem [thread:$0]  %s4, 16, %s41, [#allocation6]
    $region21: #{tpu_custom_call.1} parent=1 // pred_fallthru
      _
    // Predicated region
    $region22: #{tpu_custom_call.1} parent=1 // pred_check
      _
    $region23: #{tpu_custom_call.1} parent=1 // pred_check_branch
      %45 = sbr.rel (0) target = $region25
    $region24: #{tpu_custom_call.1} parent=1 // pred_region
      _
    $region25: #{tpu_custom_call.1} parent=1 // pred_fallthru
      _
    // Predicated region
    $region26: #{tpu_custom_call.1} parent=1 // pred_check
      _
    $region27: #{tpu_custom_call.1} parent=1 // pred_check_branch
      %47 = sbr.rel (0) target = $region29
    $region28: #{tpu_custom_call.1} parent=1 // pred_region
      _
    $region29: #{tpu_custom_call.1} parent=1 // pred_fallthru
      _
    // Predicated region
    $region30: #{tpu_custom_call.1} parent=1 // pred_check
      _
    $region31: #{tpu_custom_call.1} parent=1 // pred_check_branch
      %49 = sbr.rel (0) target = $region33
    $region32: #{tpu_custom_call.1} parent=1 // pred_region
      _
    $region33: #{tpu_custom_call.1} parent=1 // pred_fallthru
      _
    // Predicated region
    $region34: #{tpu_custom_call.1} parent=1 // pred_check
      _
    $region35: #{tpu_custom_call.1} parent=1 // pred_check_branch
      %51 = sbr.rel (0) target = $region37
    $region36: #{tpu_custom_call.1} parent=1 // pred_region
      %52 = dma.done [#allocation3], 128
    $region37: #{tpu_custom_call.1} parent=1 // pred_fallthru
      _
    // Predicated region
    $region38: #{tpu_custom_call.1} parent=1 // pred_check
      _
    $region39: #{tpu_custom_call.1} parent=1 // pred_check_branch
      %54 = sbr.rel (0) target = $region41
    $region40: #{tpu_custom_call.1} parent=1 // pred_region
      %55 = dma.done [#allocation6], 16
    $region41: #{tpu_custom_call.1} parent=1 // pred_fallthru
      _
    %v56 = vld [vmem:[#allocation2] sm:$0xff]
    %v57 = vld [vmem:[%s1] sm:$0xff]
    %v58 = vld [vmem:[%s1 + $0x8] sm:$0xff]
    %v59 = vld [vmem:[%s2] sm:$0x1]
    %v61 = vlaneseq
    %v62 = vshrl.u32 %v61, 7
    %v63 = vsub.s32 0, %v62
    %v64 = vrot.slane %v59, %v63
    %vm66 = vcmask 130048
    %v68 = vsel %vm66, %v56, 0
    %70 = vmatprep.subr.mxu0 0.0
    %71 = vmatpush1.msra.mxu0 0.0
    %72 = vmatprep.subr.mxu0 0.0
    %73 = vmatpush1.msra.mxu0 0.0
    %74 = vmatprep.subr.mxu0 0.0
    %75 = vmatpush1.msra.mxu0 0.0
    %76 = vmatprep.subr.mxu0 0.0
    %77 = vmatpush1.msra.mxu0 0.0
    %78 = vmatprep.subr.mxu0 0.0
    %79 = vmatpush1.msra.mxu0 0.0
    %80 = vmatprep.subr.mxu0 0.0
    %81 = vmatpush1.msra.mxu0 0.0
    %82 = vmatprep.subr.mxu0 0.0
    %83 = vmatpush1.msra.mxu0 0.0
    %84 = vmatprep.subr.mxu0 0.0
    %85 = vmatpush1.msra.mxu0 0.0
    %86 = vmatprep.subr.mxu0 0.0
    %87 = vmatpush1.msra.mxu0 0.0
    %88 = vmatprep.subr.mxu0 0.0
    %89 = vmatpush1.msra.mxu0 0.0
    %90 = vmatprep.subr.mxu0 0.0
    %91 = vmatpush1.msra.mxu0 0.0
    %92 = vmatprep.subr.mxu0 0.0
    %93 = vmatpush1.msra.mxu0 0.0
    %94 = vmatprep.subr.mxu0 0.0
    %95 = vmatpush1.msra.mxu0 0.0
    %96 = vmatprep.subr.mxu0 0.0
    %97 = vmatpush1.msra.mxu0 0.0
    %98 = vmatprep.subr.mxu0 0.0
    %99 = vmatpush1.msra.mxu0 %v58
    %100 = vmatprep.subr.mxu0 0.0
    %101 = vmatpush1.msra.mxu0 %v57
    %102 = vmatprep.subr.mxu0 0.0
    %103 = vmatpush2.msra.mxu0 0.0
    %104 = vmatprep.subr.mxu0 0.0
    %105 = vmatpush2.msra.mxu0 0.0
    %106 = vmatprep.subr.mxu0 0.0
    %107 = vmatpush2.msra.mxu0 0.0
    %108 = vmatprep.subr.mxu0 0.0
    %109 = vmatpush2.msra.mxu0 0.0
    %110 = vmatprep.subr.mxu0 0.0
    %111 = vmatpush2.msra.mxu0 0.0
    %112 = vmatprep.subr.mxu0 0.0
    %113 = vmatpush2.msra.mxu0 0.0
    %114 = vmatprep.subr.mxu0 0.0
    %115 = vmatpush2.msra.mxu0 0.0
    %116 = vmatprep.subr.mxu0 0.0
    %117 = vmatpush2.msra.mxu0 0.0
    %118 = vmatprep.subr.mxu0 0.0
    %119 = vmatpush2.msra.mxu0 0.0
    %120 = vmatprep.subr.mxu0 0.0
    %121 = vmatpush2.msra.mxu0 0.0
    %122 = vmatprep.subr.mxu0 0.0
    %123 = vmatpush2.msra.mxu0 0.0
    %124 = vmatprep.subr.mxu0 0.0
    %125 = vmatpush2.msra.mxu0 0.0
    %126 = vmatprep.subr.mxu0 0.0
    %127 = vmatpush2.msra.mxu0 0.0
    %128 = vmatprep.subr.mxu0 0.0
    %129 = vmatpush2.msra.mxu0 0.0
    %130 = vmatprep.subr.mxu0 0.0
    %131 = vmatpush2.msra.mxu0 0.0
    %132 = vmatprep.subr.mxu0 0.0
    %133 = vmatpush2.msra.mxu0 0.0
    %134 = vmatprep.mubr.f32.mxu0 0.0
    %135 = vmatmul.mubr.f32.gmra.mxu0 %v68
    %v136 = vpop.f32.mrf.mxu0
    %v137 = vadd.f32 %v64, %v136
    %v138 = vpop.f32.mrf.mxu0
    %139 = vdwg.mxu0
    %v140 = vmax.f32 %v137, 0.0
    %v141 = vld [vmem:[%s3] sm:$0xff]
    %v142 = vld [vmem:[%s3 + $0x8] sm:$0xff]
    %v143 = vld [vmem:[%s3 + $0x10] sm:$0xff]
    %v144 = vld [vmem:[%s3 + $0x18] sm:$0xff]
    %v145 = vld [vmem:[#allocation5] sm:$0x1]
    %v147 = vlaneseq
    %v148 = vshrl.u32 %v147, 7
    %v149 = vsub.s32 0, %v148
    %v150 = vrot.slane %v145, %v149
    %vm152 = vcmask 261120
    %v154 = vsel %vm152, %v140, 0
    %156 = vmatprep.subr.mxu0 0.0
    %157 = vmatpush1.msra.mxu0 0.0
    %158 = vmatprep.subr.mxu0 0.0
    %159 = vmatpush1.msra.mxu0 0.0
    %160 = vmatprep.subr.mxu0 0.0
    %161 = vmatpush1.msra.mxu0 0.0
    %162 = vmatprep.subr.mxu0 0.0
    %163 = vmatpush1.msra.mxu0 0.0
    %164 = vmatprep.subr.mxu0 0.0
    %165 = vmatpush1.msra.mxu0 0.0
    %166 = vmatprep.subr.mxu0 0.0
    %167 = vmatpush1.msra.mxu0 0.0
    %168 = vmatprep.subr.mxu0 0.0
    %169 = vmatpush1.msra.mxu0 0.0
    %170 = vmatprep.subr.mxu0 0.0
    %171 = vmatpush1.msra.mxu0 0.0
    %172 = vmatprep.subr.mxu0 0.0
    %173 = vmatpush1.msra.mxu0 0.0
    %174 = vmatprep.subr.mxu0 0.0
    %175 = vmatpush1.msra.mxu0 0.0
    %176 = vmatprep.subr.mxu0 0.0
    %177 = vmatpush1.msra.mxu0 0.0
    %178 = vmatprep.subr.mxu0 0.0
    %179 = vmatpush1.msra.mxu0 0.0
    %180 = vmatprep.subr.mxu0 0.0
    %181 = vmatpush1.msra.mxu0 %v144
    %182 = vmatprep.subr.mxu0 0.0
    %183 = vmatpush1.msra.mxu0 %v143
    %184 = vmatprep.subr.mxu0 0.0
    %185 = vmatpush1.msra.mxu0 %v142
    %186 = vmatprep.subr.mxu0 0.0
    %187 = vmatpush1.msra.mxu0 %v141
    %188 = vmatprep.subr.mxu0 0.0
    %189 = vmatpush2.msra.mxu0 0.0
    %190 = vmatprep.subr.mxu0 0.0
    %191 = vmatpush2.msra.mxu0 0.0
    %192 = vmatprep.subr.mxu0 0.0
    %193 = vmatpush2.msra.mxu0 0.0
    %194 = vmatprep.subr.mxu0 0.0
    %195 = vmatpush2.msra.mxu0 0.0
    %196 = vmatprep.subr.mxu0 0.0
    %197 = vmatpush2.msra.mxu0 0.0
    %198 = vmatprep.subr.mxu0 0.0
    %199 = vmatpush2.msra.mxu0 0.0
    %200 = vmatprep.subr.mxu0 0.0
    %201 = vmatpush2.msra.mxu0 0.0
    %202 = vmatprep.subr.mxu0 0.0
    %203 = vmatpush2.msra.mxu0 0.0
    %204 = vmatprep.subr.mxu0 0.0
    %205 = vmatpush2.msra.mxu0 0.0
    %206 = vmatprep.subr.mxu0 0.0
    %207 = vmatpush2.msra.mxu0 0.0
    %208 = vmatprep.subr.mxu0 0.0
    %209 = vmatpush2.msra.mxu0 0.0
    %210 = vmatprep.subr.mxu0 0.0
    %211 = vmatpush2.msra.mxu0 0.0
    %212 = vmatprep.subr.mxu0 0.0
    %213 = vmatpush2.msra.mxu0 0.0
    %214 = vmatprep.subr.mxu0 0.0
    %215 = vmatpush2.msra.mxu0 0.0
    %216 = vmatprep.subr.mxu0 0.0
    %217 = vmatpush2.msra.mxu0 0.0
    %218 = vmatprep.subr.mxu0 0.0
    %219 = vmatpush2.msra.mxu0 0.0
    %220 = vmatprep.mubr.f32.mxu0 0.0
    %221 = vmatmul.mubr.f32.gmra.mxu0 %v154
    %v222 = vpop.f32.mrf.mxu0
    %v223 = vadd.f32 %v150, %v222
    %v224 = vpop.f32.mrf.mxu0
    %225 = vdwg.mxu0
    %v226 = vmax.f32 %v223, 0.0
    %v227 = vld [vmem:[%s5] sm:$0xff]
    %v228 = vld [vmem:[%s5 + $0x8] sm:$0xff]
    %v229 = vld [vmem:[%s5 + $0x10] sm:$0xff]
    %v230 = vld [vmem:[%s5 + $0x18] sm:$0xff]
    %v231 = vld [vmem:[%s6] sm:$0x1]
    %v233 = vlaneseq
    %v234 = vshrl.u32 %v233, 7
    %v235 = vsub.s32 0, %v234
    %v236 = vrot.slane %v231, %v235
    %v239 = vsel %vm152, %v226, 0
    %241 = vmatprep.subr.mxu0 0.0
    %242 = vmatpush1.msra.mxu0 0.0
    %243 = vmatprep.subr.mxu0 0.0
    %244 = vmatpush1.msra.mxu0 0.0
    %245 = vmatprep.subr.mxu0 0.0
    %246 = vmatpush1.msra.mxu0 0.0
    %247 = vmatprep.subr.mxu0 0.0
    %248 = vmatpush1.msra.mxu0 0.0
    %249 = vmatprep.subr.mxu0 0.0
    %250 = vmatpush1.msra.mxu0 0.0
    %251 = vmatprep.subr.mxu0 0.0
    %252 = vmatpush1.msra.mxu0 0.0
    %253 = vmatprep.subr.mxu0 0.0
    %254 = vmatpush1.msra.mxu0 0.0
    %255 = vmatprep.subr.mxu0 0.0
    %256 = vmatpush1.msra.mxu0 0.0
    %257 = vmatprep.subr.mxu0 0.0
    %258 = vmatpush1.msra.mxu0 0.0
    %259 = vmatprep.subr.mxu0 0.0
    %260 = vmatpush1.msra.mxu0 0.0
    %261 = vmatprep.subr.mxu0 0.0
    %262 = vmatpush1.msra.mxu0 0.0
    %263 = vmatprep.subr.mxu0 0.0
    %264 = vmatpush1.msra.mxu0 0.0
    %265 = vmatprep.subr.mxu0 0.0
    %266 = vmatpush1.msra.mxu0 %v230
    %267 = vmatprep.subr.mxu0 0.0
    %268 = vmatpush1.msra.mxu0 %v229
    %269 = vmatprep.subr.mxu0 0.0
    %270 = vmatpush1.msra.mxu0 %v228
    %271 = vmatprep.subr.mxu0 0.0
    %272 = vmatpush1.msra.mxu0 %v227
    %273 = vmatprep.subr.mxu0 0.0
    %274 = vmatpush2.msra.mxu0 0.0
    %275 = vmatprep.subr.mxu0 0.0
    %276 = vmatpush2.msra.mxu0 0.0
    %277 = vmatprep.subr.mxu0 0.0
    %278 = vmatpush2.msra.mxu0 0.0
    %279 = vmatprep.subr.mxu0 0.0
    %280 = vmatpush2.msra.mxu0 0.0
    %281 = vmatprep.subr.mxu0 0.0
    %282 = vmatpush2.msra.mxu0 0.0
    %283 = vmatprep.subr.mxu0 0.0
    %284 = vmatpush2.msra.mxu0 0.0
    %285 = vmatprep.subr.mxu0 0.0
    %286 = vmatpush2.msra.mxu0 0.0
    %287 = vmatprep.subr.mxu0 0.0
    %288 = vmatpush2.msra.mxu0 0.0
    %289 = vmatprep.subr.mxu0 0.0
    %290 = vmatpush2.msra.mxu0 0.0
    %291 = vmatprep.subr.mxu0 0.0
    %292 = vmatpush2.msra.mxu0 0.0
    %293 = vmatprep.subr.mxu0 0.0
    %294 = vmatpush2.msra.mxu0 0.0
    %295 = vmatprep.subr.mxu0 0.0
    %296 = vmatpush2.msra.mxu0 0.0
    %297 = vmatprep.subr.mxu0 0.0
    %298 = vmatpush2.msra.mxu0 0.0
    %299 = vmatprep.subr.mxu0 0.0
    %300 = vmatpush2.msra.mxu0 0.0
    %301 = vmatprep.subr.mxu0 0.0
    %302 = vmatpush2.msra.mxu0 0.0
    %303 = vmatprep.subr.mxu0 0.0
    %304 = vmatpush2.msra.mxu0 0.0
    %305 = vmatprep.mubr.f32.mxu0 0.0
    %306 = vmatmul.mubr.f32.gmra.mxu0 %v239
    %v307 = vpop.f32.mrf.mxu0
    %v308 = vadd.f32 %v236, %v307
    %v309 = vpop.f32.mrf.mxu0
    %310 = vdwg.mxu0
    %v311 = vmax.f32 %v308, -20.0
    %v312 = vmin.f32 %v311, 2.0
    %v313 = vld [vmem:[%s7] sm:$0xff]
    %v314 = vmul.f32 %v312, 1.442695
    %v315 = vpow.pop %v314
    %317 = vrot.lane.b32.xlu0 %v313, 8
    %v318 = vpop.permute.xlu0 %317
    %v320 = vmul.f32 %v315, %v318
    %322 = vrot.lane.b32.xlu0 %v320, 120
    %v323 = vpop.permute.xlu0 %322
    %v325 = vadd.f32 %v308, %v323
    %v326 = vand.u32 2147483647, %v325
    %v327 = vmul.f32 %v326, -2.0
    %v328 = vmul.f32 %v327, 1.442695
    %v329 = vpow.pop %v328
    %v330 = vsub.f32 1.0, %v329
    %v331 = vadd.f32 %v329, 1.0
    %v332 = vrcp.pop %v331
    %v333 = vmul.f32 %v330, %v332
    %vm334 = vcmp.ge.f32.partialorder %v325, 0.0
    %v335 = vsub.f32 0.0, %v333
    %v336 = vsel %vm334, %v333, %v335
    %vm337 = vcmask 64512
    %338 = vst.msk [vmem:[#allocation7] sm:$0xff] %vm337, %v336
    %v339 = vmul.f32 %v313, %v313
    %v340 = vmul.f32 %v339, -0.5
    %342 = vrot.lane.b32.xlu0 %v312, 120
    %v343 = vpop.permute.xlu0 %342
    %v345 = vsub.f32 %v340, %v343
    %v346 = vsub.f32 %v345, 0.9189385
    %v347 = vmul.f32 %v325, -2.0
    %v348 = vmax.f32 %v347, 0.0
    %v349 = vadd.f32 %v329, 1.0
    %v350 = vlog2.pop %v349
    %v351 = vmul.f32 %v350, 0.6931472
    %v352 = vmul.f32 -0.5, %v329
    %v353 = vadd.f32 %v352, 1.0
    %v354 = vmul.f32 %v353, %v329
    %v355 = vand.u32 2147483647, %v329
    %vm356 = vcmp.lt.f32.partialorder %v355, 0.0004427343
    %v357 = vsel %vm356, %v354, %v351
    %v358 = vadd.f32 %v348, %v357
    %v359 = vsub.f32 0.6931472, %v325
    %v360 = vsub.f32 %v359, %v358
    %v361 = vmul.f32 %v360, 2.0
    %v362 = vsub.f32 %v346, %v361
    %v363 = vsel %vm337, %v362, 0.0
    %364 = vadd.xlane.f32.xlu0 %v363
    %v365 = vpop.xlane.xlu0 %364
    %vm366 = vcmask 7168
    %367 = vst.msk [vmem:[%s9] sm:$0xff] %vm366, %v365
    // Predicated region
    $region42: #{tpu_custom_call.1} parent=1 // pred_check
      _
    $region43: #{tpu_custom_call.1} parent=1 // pred_check_branch
      %369 = sbr.rel (0) target = $region45
    $region44: #{tpu_custom_call.1} parent=1 // pred_region
      %s371 = ssub.s32 128, 128
      %372 = vsyncadd [#allocation4], %s371
      %s374 = sshll.u32 [#allocation7], 4
      %s375 = int_to_ptr.vmem [resolvable:$true] %s374
      %377 = dma.vmem_to_hbm [thread:$0]  %s375, 128, %s8, [#allocation4]
    $region45: #{tpu_custom_call.1} parent=1 // pred_fallthru
      _
    // Predicated region
    $region46: #{tpu_custom_call.1} parent=1 // pred_check
      _
    $region47: #{tpu_custom_call.1} parent=1 // pred_check_branch
      %379 = sbr.rel (0) target = $region49
    $region48: #{tpu_custom_call.1} parent=1 // pred_region
      _
    $region49: #{tpu_custom_call.1} parent=1 // pred_fallthru
      _
    // Predicated region
    $region50: #{tpu_custom_call.1} parent=1 // pred_check
      _
    $region51: #{tpu_custom_call.1} parent=1 // pred_check_branch
      %381 = sbr.rel (0) target = $region53
    $region52: #{tpu_custom_call.1} parent=1 // pred_region
      %382 = dma.done [#allocation4], 128
    $region53: #{tpu_custom_call.1} parent=1 // pred_fallthru
      _
    // Predicated region
    $region54: #{tpu_custom_call.1} parent=1 // pred_check
      _
    $region55: #{tpu_custom_call.1} parent=1 // pred_check_branch
      %384 = sbr.rel (0) target = $region57
    $region56: #{tpu_custom_call.1} parent=1 // pred_region
      _
    $region57: #{tpu_custom_call.1} parent=1 // pred_fallthru
      _
    %385 = vsyncpa [#allocation3], 1
    %386 = vsyncpa [#allocation6], 1
    %387 = vsyncpa [#allocation4], 1

</llo_original>
